<compile_context>
chip_gen: v7x
topology: tpu7x:2x2x1
jax: 0.10.0
libtpu: 0.0.40
codegen_flags: <defaults>
</compile_context>

<pallas_src>
import functools

import jax
import jax.numpy as jnp
from jax.experimental import pallas as pl
from jax.experimental.pallas import tpu as pltpu


def _ls_ce_kernel(target_ref, preds_ref, out_ref, *,
                  num_rows, num_class, tile_n, epsilon, per_row):
    """One grid step over a (tile_n, C) block of preds.

    per_row_loss[n] = lse_n - sum_c x[n, c] * (eps/C + (1-eps) * [c == t_n])
    which equals eps/C * (-sum_c logp) + (1-eps) * (-logp[t_n])  (linear fuse).

    per_row=True : store the per-row column (reduction='none').
    per_row=False: mask padded rows and store ONE partial sum for this chunk.
    """
    x = preds_ref[...].astype(jnp.float32)                      # (tile_n, C)

    # Numerically stable logsumexp per row (no logp tensor materialized).
    m = jnp.max(x, axis=-1, keepdims=True)                      # (tile_n, 1)
    # NOTE(v6e/v7x): if EUP exp ever saturates with bf16 inputs, exp can be
    # evaluated in bf16 here (EUP supports bf16 on v6e/v7x) -- keep f32 on v5e.
    sumexp = jnp.sum(jnp.exp(x - m), axis=-1, keepdims=True)    # EUP + XLU
    lse = m + jnp.log(sumexp)                                   # (tile_n, 1)

    # Single weighted lane reduction replaces sum_x and the one-hot gather.
    tgt = target_ref[...]                                       # (tile_n, 1) i32
    cls = jax.lax.broadcasted_iota(jnp.int32, x.shape, 1)
    base_w = jnp.float32(epsilon / num_class)
    hit_w = jnp.float32(epsilon / num_class + (1.0 - epsilon))
    w = jnp.where(cls == tgt, hit_w, base_w)                    # (tile_n, C)
    wsum = jnp.sum(x * w, axis=-1, keepdims=True)               # (tile_n, 1)

    loss = lse - wsum                                           # (tile_n, 1)

    if per_row:
        # Out-of-range rows are dropped by the masked output store.
        out_ref[...] = loss
    else:
        # We accumulate across rows, so padded remainder rows MUST be zeroed
        # (their contents are undefined and may be inf/NaN after exp).
        i = pl.program_id(0)
        row = jax.lax.broadcasted_iota(jnp.int32, (tile_n, 1), 0) + i * tile_n
        loss = jnp.where(row < num_rows, loss, jnp.float32(0.0))
        out_ref[...] = jnp.sum(loss, axis=0, keepdims=True).reshape(1, 1, 1)


def _pick_vmem_limit_bytes():
    """Generation-aware VMEM limit (v7x: 64 MiB physical, v5e/v6e: 128 MiB)."""
    try:
        phys = pltpu.get_tpu_info().vmem_capacity_bytes
    except Exception:
        phys = 64 * 1024 * 1024  # conservative fallback (v7x-sized)
    return int(min(phys * 3 // 4, 96 * 1024 * 1024))


def _pick_tile_n(n_rows, n_class, itemsize, vmem_limit_bytes):
    """Largest useful row tile under the VMEM budget.

    Budget model: 2 pipeline buffers of the preds block + ~5 f32-sized
    in-kernel temporaries (f32 upcast, exp arg, class iota, weights, product).
    ~80% of vmem_limit is usable (no extra halving -- the buffers are already
    counted).  The tile also targets ~8 MiB of preds per step so small-C
    inputs amortize the fixed per-step overhead, and is capped so there are
    at least 2 grid steps for the 2 v7x TensorCores when N allows.
    """
    bytes_per_row = n_class * (2 * itemsize + 5 * 4) + 64
    cap = max(8, int(vmem_limit_bytes * 0.8) // bytes_per_row)
    target = max(8, (8 * 1024 * 1024) // max(1, n_class * itemsize))
    tile = min(cap, target, n_rows)
    if tile >= n_rows and n_rows > 16:
        tile = max(8, ((n_rows // 2) // 8) * 8)      # >=2 steps for megacore
    if tile >= n_rows:
        return n_rows                                # single full-array block
    return max(8, (tile // 8) * 8)                   # sublane-aligned


def label_smoothing_cross_entropy(preds, target, epsilon=0.1, reduction="mean",
                                  tile_n=None):
    """Pallas implementation of LabelSmoothingCrossEntropy.forward.

    preds:  (N, C) logits -- f32 or bf16 (bf16 halves HBM traffic; the kernel
            upcasts to f32 in VMEM, so accuracy is unchanged).
    target: (N,) integer class ids.
    epsilon must be a static Python float (it is folded into the kernel).
    """
    if reduction not in ("mean", "sum", "none"):
        raise ValueError(f"unknown reduction: {reduction}")

    N, C = preds.shape
    itemsize = jnp.dtype(preds.dtype).itemsize
    vmem_limit = _pick_vmem_limit_bytes()
    if tile_n is None:
        tile_n = _pick_tile_n(N, C, itemsize, vmem_limit)
    tile_n = int(tile_n)
    num_chunks = pl.cdiv(N, tile_n)

    target2d = target.astype(jnp.int32).reshape(N, 1)
    per_row = reduction == "none"

    kernel = functools.partial(
        _ls_ce_kernel, num_rows=N, num_class=C, tile_n=tile_n,
        epsilon=float(epsilon), per_row=per_row)

    if per_row:
        out_shape = jax.ShapeDtypeStruct((N, 1), jnp.float32)
        out_spec = pl.BlockSpec((tile_n, 1), lambda i: (i, 0))
        out_bytes = N * 4
    else:
        # One partial sum per chunk; last-two block dims equal the array dims
        # so the (8,128) tiling rule is trivially satisfied.
        out_shape = jax.ShapeDtypeStruct((num_chunks, 1, 1), jnp.float32)
        out_spec = pl.BlockSpec((1, 1, 1), lambda i: (i, 0, 0))
        out_bytes = num_chunks * 4

    cost = pl.CostEstimate(
        flops=6 * N * C,
        transcendentals=N * C + N,
        bytes_accessed=N * C * itemsize + N * 4 + out_bytes,
    )

    out = pl.pallas_call(
        kernel,
        out_shape=out_shape,
        grid_spec=pltpu.PrefetchScalarGridSpec(
            num_scalar_prefetch=0,
            grid=(num_chunks,),
            in_specs=[
                pl.BlockSpec((tile_n, 1), lambda i: (i, 0)),   # target
                # If xprof ever shows exposed DMA between steps, sweep
                # pipeline_mode=pl.Buffered(3) here (re-check VMEM on v7x).
                pl.BlockSpec((tile_n, C), lambda i: (i, 0)),   # preds
            ],
            out_specs=out_spec,
        ),
        compiler_params=pltpu.CompilerParams(
            dimension_semantics=("parallel",),   # independent row chunks
            vmem_limit_bytes=vmem_limit,
        ),
        cost_estimate=cost,
    )(target2d, preds)

    if per_row:
        return out[:, 0]
    total = jnp.sum(out)
    if reduction == "mean":
        return total / jnp.float32(N)
    return total


def _reference(preds, target, epsilon=0.1, reduction="mean"):
    num_class = preds.shape[-1]
    log_preds = jax.nn.log_softmax(preds.astype(jnp.float32), axis=-1)
    per_row_sum = -jnp.sum(log_preds, axis=-1)
    nll_rows = -jnp.take_along_axis(log_preds, target[:, None], axis=-1)[:, 0]
    if reduction == "mean":
        loss, nll = per_row_sum.mean(), nll_rows.mean()
    elif reduction == "sum":
        loss, nll = per_row_sum.sum(), nll_rows.sum()
    else:
        loss, nll = per_row_sum, nll_rows
    return epsilon * (loss / num_class) + (1 - epsilon) * nll


if __name__ == "__main__":
    key = jax.random.PRNGKey(0)
    k1, k2 = jax.random.split(key)

    # N deliberately not a multiple of the auto-picked tile (8) so the
    # remainder-row masking + cross-chunk partial-sum paths are exercised.
    N, C = 20, 32
    preds = jax.random.normal(k1, (N, C), dtype=jnp.float32)
    target = jax.random.randint(k2, (N,), 0, C, dtype=jnp.int32)

    for reduction in ("mean", "sum", "none"):
        out = label_smoothing_cross_entropy(preds, target, epsilon=0.1,
                                            reduction=reduction)
        out = jax.block_until_ready(out)
        ref = _reference(preds, target, epsilon=0.1, reduction=reduction)
        assert jnp.allclose(out, ref, rtol=1e-5, atol=1e-5), (reduction, out, ref)

    # Single full-array block path (block dims == array dims, one grid step).
    out = label_smoothing_cross_entropy(preds, target, epsilon=0.1,
                                        reduction="mean", tile_n=N)
    out = jax.block_until_ready(out)
    ref = _reference(preds, target, epsilon=0.1, reduction="mean")
    assert jnp.allclose(out, ref, rtol=1e-5, atol=1e-5), (out, ref)

    print("KERNEL_OK")
</pallas_src>

<mosaic_0001>
module attributes {stable_mosaic.version = 11 : i64} {
  func.func @_ls_ce_kernel(%arg0: i32, %arg1: memref<8x1xi32, #tpu.memory_space<vmem>>, %arg2: memref<8x32xf32, #tpu.memory_space<vmem>>, %arg3: memref<1x1x1xf32, #tpu.memory_space<vmem>>) attributes {dimension_semantics = [#tpu.dimension_semantics<parallel>], iteration_bounds = array<i64: 3>, scalar_prefetch = 0 : i64, scratch_operands = 0 : i64, tpu.core_type = #tpu.core_type<tc>, window_params = [{transform_indices = @transform_0, window_bounds = array<i64: 8, 1>}, {transform_indices = @transform_1, window_bounds = array<i64: 8, 32>}, {transform_indices = @transform_2, window_bounds = array<i64: 1, 1, 1>}]} {
    %c0 = arith.constant 0 : index
    %c0_0 = arith.constant 0 : index
    %0 = vector.load %arg2[%c0, %c0_0] : memref<8x32xf32, #tpu.memory_space<vmem>>, vector<8x32xf32>
    %cst = arith.constant dense<0xFF800000> : vector<8xf32>
    %1 = vector.multi_reduction <maximumf>, %0, %cst [1] : vector<8x32xf32> to vector<8xf32>
    %2 = vector.shape_cast %1 : vector<8xf32> to vector<8x1xf32>
    %3 = vector.broadcast %2 : vector<8x1xf32> to vector<8x32xf32>
    %4 = arith.subf %0, %3 : vector<8x32xf32>
    %5 = math.exp %4 : vector<8x32xf32>
    %cst_1 = arith.constant dense<0.000000e+00> : vector<8xf32>
    %6 = vector.multi_reduction <add>, %5, %cst_1 [1] : vector<8x32xf32> to vector<8xf32>
    %7 = vector.shape_cast %6 : vector<8xf32> to vector<8x1xf32>
    %8 = math.log %7 : vector<8x1xf32>
    %9 = arith.addf %2, %8 : vector<8x1xf32>
    %c0_2 = arith.constant 0 : index
    %c0_3 = arith.constant 0 : index
    %10 = vector.load %arg1[%c0_2, %c0_3] : memref<8x1xi32, #tpu.memory_space<vmem>>, vector<8x1xi32>
    %11 = tpu.iota {dimensions = array<i32: 1>} : vector<8x32xi32>
    %12 = vector.broadcast %10 : vector<8x1xi32> to vector<8x32xi32>
    %13 = arith.cmpi eq, %11, %12 : vector<8x32xi32>
    %cst_4 = arith.constant 0.903124988 : f32
    %cst_5 = arith.constant 3.125000e-03 : f32
    %14 = vector.broadcast %cst_4 : f32 to vector<8x32xf32>
    %15 = vector.broadcast %cst_5 : f32 to vector<8x32xf32>
    %16 = arith.select %13, %14, %15 : vector<8x32xi1>, vector<8x32xf32>
    %17 = arith.mulf %0, %16 : vector<8x32xf32>
    %cst_6 = arith.constant dense<0.000000e+00> : vector<8xf32>
    %18 = vector.multi_reduction <add>, %17, %cst_6 [1] : vector<8x32xf32> to vector<8xf32>
    %19 = vector.shape_cast %18 : vector<8xf32> to vector<8x1xf32>
    %20 = arith.subf %9, %19 : vector<8x1xf32>
    %21 = tpu.iota {dimensions = array<i32: 0>} : vector<8x1xi32>
    %c8_i32 = arith.constant 8 : i32
    %22 = arith.muli %arg0, %c8_i32 : i32
    %23 = vector.broadcast %22 : i32 to vector<8x1xi32>
    %24 = arith.addi %21, %23 : vector<8x1xi32>
    %c20_i32 = arith.constant 20 : i32
    %25 = vector.broadcast %c20_i32 : i32 to vector<8x1xi32>
    %26 = arith.cmpi slt, %24, %25 : vector<8x1xi32>
    %cst_7 = arith.constant 0.000000e+00 : f32
    %27 = vector.broadcast %cst_7 : f32 to vector<8x1xf32>
    %28 = arith.select %26, %20, %27 : vector<8x1xi1>, vector<8x1xf32>
    %cst_8 = arith.constant dense<0.000000e+00> : vector<1xf32>
    %29 = vector.multi_reduction <add>, %28, %cst_8 [0] : vector<8x1xf32> to vector<1xf32>
    %30 = vector.shape_cast %29 : vector<1xf32> to vector<1x1xf32>
    %31 = vector.shape_cast %30 : vector<1x1xf32> to vector<1x1x1xf32>
    %c0_9 = arith.constant 0 : index
    %c0_10 = arith.constant 0 : index
    %c0_11 = arith.constant 0 : index
    %32 = vector.load %arg3[%c0_9, %c0_10, %c0_11] : memref<1x1x1xf32, #tpu.memory_space<vmem>>, vector<1x1x1xf32>
    tpu.vector_store %arg3[%c0_9, %c0_10, %c0_11], %31 {strides = array<i32>} : memref<1x1x1xf32, #tpu.memory_space<vmem>>, vector<1x1x1xf32>,
    return
  }
  func.func @transform_0(%arg0: i32) -> (i32, i32) {
    %c0_i32 = arith.constant 0 : i32
    %c0_i32_0 = arith.constant 0 : i32
    return %arg0, %c0_i32 : i32, i32
  }
  func.func @transform_1(%arg0: i32) -> (i32, i32) {
    %c0_i32 = arith.constant 0 : i32
    %c0_i32_0 = arith.constant 0 : i32
    return %arg0, %c0_i32 : i32, i32
  }
  func.func @transform_2(%arg0: i32) -> (i32, i32, i32) {
    %c0_i32 = arith.constant 0 : i32
    %c0_i32_0 = arith.constant 0 : i32
    %c0_i32_1 = arith.constant 0 : i32
    return %arg0, %c0_i32, %c0_i32_0 : i32, i32, i32
  }
}

</mosaic_0001>

<llo_original>
// kernel: tpu_custom_call.1
$region0: #{tpu_custom_call.1}
  #allocation0 [shape = 'u32[]', space=smem, size = 0x4, offset = 0x4, fixed_abs, tag = 'smem constant byte address 0x4 - core index']
  #allocation1 [shape = 'u32[144,128]{1,0:T(1,128)}', space=vmem, size = 0x12000, scoped, tag = 'internal scratch']
  %s0 = inlined_call_operand.vmem [shape: s32[20,1], index: 0, kind: input, shape index: {}]
  %s1 = inlined_call_operand.vmem [shape: f32[20,32], index: 1, kind: input, shape index: {}]
  %s2 = inlined_call_operand.vmem [shape: f32[3,1,1], index: 2, kind: output, shape index: {}]
  %s3 = sld [smem:[#allocation0]]
  $region41: #{tpu_custom_call.1} parent=0
    _
  %s5 = ssub.s32 1, %s3
  %s6 = scalar_select 0, %s5, %s3
  loop: start=0, step=1, limit=5
  $region2: #{tpu_custom_call.1} parent=0 // loop_pre_header
    _
  $region3: #{tpu_custom_call.1} parent=0 // loop_header
    %s8 = sphi 0, %s12
    %p9 = scmp.ge.s32.totalorder %s8, 5
    %s18 = sphi 0, %s20
    %s21 = sphi 0, %s18
    %s22 = sphi 0, %s21
    %s38 = sphi 0, %s22
    %s44 = sphi 0, %s46
    %s47 = sphi 0, %s44
    %s48 = sphi 0, %s47
    %s64 = sphi 0, %s48
    %s70 = sphi 0, %s72
    %s73 = sphi 0, %s70
    %s74 = sphi 0, %s73
    %s90 = sphi 0, %s74
  $region4: #{tpu_custom_call.1} parent=0 // loop_header_branch
    %11 = sbr.rel (%p9) target = $region8
  $region5: #{tpu_custom_call.1} parent=0 // loop_body
    %s13 = ssub.s32 %s8, 1
    %s14 = ssub.s32 %s8, 2
    %s15 = sadd.s32 %s8, 1
    %s16 = ssub.s32 %s8, %s15
    %p17 = scmp.eq.s32.totalorder %s16, 0
    %s19 = sadd.s32 %s18, 1
    %s20 = scalar_select %p17, %s18, %s19
    %p23 = pneg %p17
    %p24 = scmp.eq.s32.totalorder %s8, 2
    %p25 = por %p23, %p24
    %p26 = scmp.ne.s32.totalorder %s18, %s21
    %p27 = scmp.eq.s32.totalorder %s8, 0
    %p28 = por %p26, %p27
    %p29 = scmp.ne.s32.totalorder %s18, %s21
    %p30 = scmp.eq.s32.totalorder %s13, 2
    %p31 = por %p29, %p30
    %p32 = scmp.ne.s32.totalorder %s21, %s22
    %p33 = scmp.eq.s32.totalorder %s13, 0
    %p34 = por %p32, %p33
    %p35 = scmp.ne.s32.totalorder %s21, %s22
    %p36 = scmp.eq.s32.totalorder %s14, 2
    %p37 = por %p35, %p36
    %p39 = scmp.ne.s32.totalorder %s22, %s38
    %p40 = scmp.eq.s32.totalorder %s14, 0
    %p41 = por %p39, %p40
    %s42 = ssub.s32 %s8, %s15
    %p43 = scmp.eq.s32.totalorder %s42, 0
    %s45 = sadd.s32 %s44, 1
    %s46 = scalar_select %p43, %s44, %s45
    %p49 = pneg %p43
    %p50 = scmp.eq.s32.totalorder %s8, 2
    %p51 = por %p49, %p50
    %p52 = scmp.ne.s32.totalorder %s44, %s47
    %p53 = scmp.eq.s32.totalorder %s8, 0
    %p54 = por %p52, %p53
    %p55 = scmp.ne.s32.totalorder %s44, %s47
    %p56 = scmp.eq.s32.totalorder %s13, 2
    %p57 = por %p55, %p56
    %p58 = scmp.ne.s32.totalorder %s47, %s48
    %p59 = scmp.eq.s32.totalorder %s13, 0
    %p60 = por %p58, %p59
    %p61 = scmp.ne.s32.totalorder %s47, %s48
    %p62 = scmp.eq.s32.totalorder %s14, 2
    %p63 = por %p61, %p62
    %p65 = scmp.ne.s32.totalorder %s48, %s64
    %p66 = scmp.eq.s32.totalorder %s14, 0
    %p67 = por %p65, %p66
    %s68 = ssub.s32 %s8, %s15
    %p69 = scmp.eq.s32.totalorder %s68, 0
    %s71 = sadd.s32 %s70, 1
    %s72 = scalar_select %p69, %s70, %s71
    %p75 = pneg %p69
    %p76 = scmp.eq.s32.totalorder %s8, 2
    %p77 = por %p75, %p76
    %p78 = scmp.ne.s32.totalorder %s70, %s73
    %p79 = scmp.eq.s32.totalorder %s8, 0
    %p80 = por %p78, %p79
    %p81 = scmp.ne.s32.totalorder %s70, %s73
    %p82 = scmp.eq.s32.totalorder %s13, 2
    %p83 = por %p81, %p82
    %p84 = scmp.ne.s32.totalorder %s73, %s74
    %p85 = scmp.eq.s32.totalorder %s13, 0
    %p86 = por %p84, %p85
    %p87 = scmp.ne.s32.totalorder %s73, %s74
    %p88 = scmp.eq.s32.totalorder %s14, 2
    %p89 = por %p87, %p88
    %p91 = scmp.ne.s32.totalorder %s74, %s90
    %p92 = scmp.eq.s32.totalorder %s14, 0
    %p93 = por %p91, %p92
    %p94 = scmp.le.s32.totalorder 1, %s8
    %p95 = scmp.lt.s32.totalorder %s8, 4
    %p96 = pnand %p94, %p95
    %p97 = pneg %p96
    // Predicated region
    $region9: #{tpu_custom_call.1} parent=5 // pred_check
      _
    $region10: #{tpu_custom_call.1} parent=5 // pred_check_branch
      %99 = sbr.rel (%p96) target = $region12
    $region11: #{tpu_custom_call.1} parent=5 // pred_region
      %s100 = ssub.s32 %s8, 1
    $region12: #{tpu_custom_call.1} parent=5 // pred_fallthru
      _
    %p101 = scmp.lt.s32.totalorder %s8, 3
    // Predicated region
    $region13: #{tpu_custom_call.1} parent=5 // pred_check
      %p102 = pneg %p101
    $region14: #{tpu_custom_call.1} parent=5 // pred_check_branch
      %104 = sbr.rel (%p102) target = $region16
    $region15: #{tpu_custom_call.1} parent=5 // pred_region
      // Predicated region
      $region17: #{tpu_custom_call.1} parent=15 // pred_check
        %p105 = pneg %p28
      $region18: #{tpu_custom_call.1} parent=15 // pred_check_branch
        %107 = sbr.rel (%p105) target = $region20
      $region19: #{tpu_custom_call.1} parent=15 // pred_region
        %p108 = scmp.lt.s32.totalorder %s8, 2
        %s109 = scalar_select %p108, %s8, 2
        %s110 = smul.addr %s109, 8
        %s111 = scalar_lea.vmem %s0, %s110
      $region20: #{tpu_custom_call.1} parent=15 // pred_fallthru
        _
      // Predicated region
      $region21: #{tpu_custom_call.1} parent=15 // pred_check
        %p112 = pneg %p54
      $region22: #{tpu_custom_call.1} parent=15 // pred_check_branch
        %114 = sbr.rel (%p112) target = $region24
      $region23: #{tpu_custom_call.1} parent=15 // pred_region
        %p115 = scmp.lt.s32.totalorder %s8, 2
        %s116 = scalar_select %p115, %s8, 2
        %s117 = smul.addr %s116, 8
        %s118 = scalar_lea.vmem %s1, %s117
      $region24: #{tpu_custom_call.1} parent=15 // pred_fallthru
        _
    $region16: #{tpu_custom_call.1} parent=5 // pred_fallthru
      _
    %p119 = scmp.le.s32.totalorder 1, %s8
    %p120 = scmp.lt.s32.totalorder %s8, 4
    %p121 = pnand %p119, %p120
    %p122 = pneg %p121
    // Predicated region
    $region25: #{tpu_custom_call.1} parent=5 // pred_check
      _
    $region26: #{tpu_custom_call.1} parent=5 // pred_check_branch
      %124 = sbr.rel (%p121) target = $region28
    $region27: #{tpu_custom_call.1} parent=5 // pred_region
      %s125 = ssub.s32 %s8, 1
      %p126 = scmp.lt.s32.totalorder %s13, 2
      %s127 = scalar_select %p126, %s13, 2
      %s128 = smul.addr %s127, 8
      %s129 = scalar_lea.vmem %s0, %s128
      %p130 = pneg %p34
      %p131 = pneg %p31
      %p132 = scmp.lt.s32.totalorder %s13, 2
      %s133 = scalar_select %p132, %s13, 2
      %s134 = smul.addr %s133, 8
      %s135 = scalar_lea.vmem %s1, %s134
      %p136 = pneg %p60
      %p137 = pneg %p57
      %p138 = pneg %p86
      %p139 = pneg %p83
      %p140 = scmp.lt.s32.totalorder %s13, 2
      %s141 = scalar_select %p140, %s13, 2
      %s142 = scalar_lea.vmem %s2, %s141
      %p143 = scmp.lt.s32.totalorder %s13, 2
      %s144 = scalar_select %p143, %s13, 2
      %s145 = smul.addr %s144, 8
      %s146 = scalar_lea.vmem %s0, %s145
      %p147 = scmp.lt.s32.totalorder %s13, 2
      %s148 = scalar_select %p147, %s13, 2
      %s149 = smul.addr %s148, 8
      %s150 = scalar_lea.vmem %s1, %s149
      %p151 = scmp.lt.s32.totalorder %s13, 2
      %s152 = scalar_select %p151, %s13, 2
      %s153 = scalar_lea.vmem %s2, %s152
      %v154 = vld [vmem:[%s150] sm:$0xff]
      %vm155 = vcmask 261120
      %v156 = vsel %vm155, %v154, -inf
      %157 = vmax.xlane.f32.xlu0 %v156
      %v158 = vpop.xlane.xlu0 %157
      %v159 = vsub.f32 %v154, %v158
      %v160 = vmul.f32 %v159, 1.442695
      %v161 = vpow.pop %v160
      %v162 = vsel %vm155, %v161, 0.0
      %163 = vadd.xlane.f32.xlu0 %v162
      %v164 = vpop.xlane.xlu0 %163
      %v165 = vlog2.pop %v164
      %v166 = vmul.f32 %v165, 0.6931472
      %v167 = vadd.f32 %v158, %v166
      %v168 = vld [vmem:[%s146] sm:$0xff]
      %v169 = vlaneseq
      %v170 = vand.u32 %v169, 127
      %171 = vset.pattern.permute.xlu0 0
      %172 = vperm.xlu0 %171, %v168
      %v173 = vpop.permute.xlu0 %172
      %vm174 = vcmp.eq.s32.totalorder %v170, %v173
      %v175 = vsel %vm174, 0.903125, 0.003125
      %v176 = vmul.f32 %v154, %v175
      %v177 = vsel %vm155, %v176, 0.0
      %178 = vadd.xlane.f32.xlu0 %v177
      %v179 = vpop.xlane.xlu0 %178
      %v180 = vsub.f32 %v167, %v179
      %v181 = vlaneseq
      %v182 = vshrl.u32 %v181, 7
      %s183 = smul.u32 %s13, 8
      %v184 = vstv %s183
      %v185 = vadd.s32 %v182, %v184
      %vm186 = vcmp.lt.s32.totalorder %v185, 20
      %v187 = vsel %vm186, %v180, 0.0
      %v188 = vrot.slane %v187, 4
      %v189 = vadd.f32 %v187, %v188
      %v190 = vrot.slane %v189, 2
      %v191 = vadd.f32 %v189, %v190
      %v192 = vrot.slane %v191, 1
      %v193 = vadd.f32 %v191, %v192
      %vm194 = vcmask 0
      %195 = vst.msk [vmem:[%s153] sm:$0x1] %vm194, %v193
      %p196 = scmp.lt.s32.totalorder %s13, 2
      %s197 = scalar_select %p196, %s13, 2
      %s198 = scalar_lea.vmem %s2, %s197
      // Predicated region
      $region29: #{tpu_custom_call.1} parent=27 // pred_check
        %p199 = pneg %p83
      $region30: #{tpu_custom_call.1} parent=27 // pred_check_branch
        %201 = sbr.rel (%p199) target = $region32
      $region31: #{tpu_custom_call.1} parent=27 // pred_region
        _
      $region32: #{tpu_custom_call.1} parent=27 // pred_fallthru
        _
    $region28: #{tpu_custom_call.1} parent=5 // pred_fallthru
      _
    %p202 = scmp.le.s32.totalorder 2, %s8
    // Predicated region
    $region33: #{tpu_custom_call.1} parent=5 // pred_check
      %p203 = pneg %p202
    $region34: #{tpu_custom_call.1} parent=5 // pred_check_branch
      %205 = sbr.rel (%p203) target = $region36
    $region35: #{tpu_custom_call.1} parent=5 // pred_region
      %s206 = ssub.s32 %s8, 2
      // Predicated region
      $region37: #{tpu_custom_call.1} parent=35 // pred_check
        %p207 = pneg %p89
      $region38: #{tpu_custom_call.1} parent=35 // pred_check_branch
        %209 = sbr.rel (%p207) target = $region40
      $region39: #{tpu_custom_call.1} parent=35 // pred_region
        %p210 = scmp.lt.s32.totalorder %s14, 2
        %s211 = scalar_select %p210, %s14, 2
        %s212 = scalar_lea.vmem %s2, %s211
      $region40: #{tpu_custom_call.1} parent=35 // pred_fallthru
        _
    $region36: #{tpu_custom_call.1} parent=5 // pred_fallthru
      _
  $region6: #{tpu_custom_call.1} parent=0 // loop_footer
    %s12 = sadd.s32 1, %s8
  $region7: #{tpu_custom_call.1} parent=0 // loop_footer_branch
    %7 = sbr.rel target = $region3
  $region8: #{tpu_custom_call.1} parent=0 // loop_exit
    _

</llo_original>
